<compile_context>
chip_gen: v5e
topology: v5e:2x2
jax: 0.10.0
libtpu: 0.0.40
codegen_flags: <defaults>
</compile_context>

<pallas_src>
import functools

import jax
import jax.numpy as jnp
from jax.experimental import pallas as pl
from jax.experimental.pallas import tpu as pltpu


def _round_up(x, m):
    return ((x + m - 1) // m) * m


def _tile_m(M, hi=512):
    """Row (M) tiling: single full-extent block, or an exact divisor that is a
    multiple of 8 in [128, hi]; otherwise pad up to a 128/256 multiple."""
    M = int(M)
    if M <= hi:
        return M, M
    for c in range(hi, 127, -8):          # largest 8-aligned exact divisor
        if M % c == 0:
            return c, M
    for c in (256, 128):
        Mp = _round_up(M, c)
        if Mp - M <= max(M // 6, c):
            return c, Mp
    return 128, _round_up(M, 128)


def _tile_n(N):
    N = int(N)
    if N % 256 == 0:
        return 256, N
    if N % 128 == 0:
        return 128, N
    if N <= 256:
        return N, N                        # full-extent block (64-ch stem, fc)
    return 128, _round_up(N, 128)


def _tile_k(K):
    K = int(K)
    if K % 128 == 0:
        for c in (1024, 512, 256, 128):
            if K % c == 0:
                return c, K
    Kp = _round_up(K, 8)
    return Kp, Kp


# --------------------------------------------------------------------------
# Pallas kernels
# --------------------------------------------------------------------------

def _mm_bn_single_kernel(a_ref, b_ref, s_ref, c_ref, o_ref, *, relu):
    """Single-K-step: C = relu?(A @ B * scale + bias), no accumulator scratch."""
    y = jnp.dot(a_ref[...], b_ref[...], preferred_element_type=jnp.float32)
    y = y * s_ref[...] + c_ref[...]
    if relu:
        y = jnp.maximum(y, 0.0)
    o_ref[...] = y.astype(o_ref.dtype)


def _mm_bn_res_single_kernel(a_ref, b_ref, s_ref, c_ref, r_ref, o_ref):
    """Single-K-step bottleneck tail: relu(A @ B * scale + bias + residual)."""
    y = jnp.dot(a_ref[...], b_ref[...], preferred_element_type=jnp.float32)
    y = y * s_ref[...] + c_ref[...] + r_ref[...].astype(jnp.float32)
    o_ref[...] = jnp.maximum(y, 0.0).astype(o_ref.dtype)


def _mm_bn_kernel(a_ref, b_ref, s_ref, c_ref, o_ref, acc_ref, *, relu):
    """Multi-K-step: f32 accumulation over the K grid axis; fused epilogue."""
    k = pl.program_id(2)
    d = jnp.dot(a_ref[...], b_ref[...], preferred_element_type=jnp.float32)

    @pl.when(k == 0)
    def _():
        acc_ref[...] = d

    @pl.when(k > 0)
    def _():
        acc_ref[...] += d

    @pl.when(k == pl.num_programs(2) - 1)
    def _():
        y = acc_ref[...] * s_ref[...] + c_ref[...]
        if relu:
            y = jnp.maximum(y, 0.0)
        o_ref[...] = y.astype(o_ref.dtype)


def _mm_bn_res_kernel(a_ref, b_ref, s_ref, c_ref, r_ref, o_ref, acc_ref):
    k = pl.program_id(2)
    d = jnp.dot(a_ref[...], b_ref[...], preferred_element_type=jnp.float32)

    @pl.when(k == 0)
    def _():
        acc_ref[...] = d

    @pl.when(k > 0)
    def _():
        acc_ref[...] += d

    @pl.when(k == pl.num_programs(2) - 1)
    def _():
        y = acc_ref[...] * s_ref[...] + c_ref[...] + r_ref[...].astype(jnp.float32)
        o_ref[...] = jnp.maximum(y, 0.0).astype(o_ref.dtype)


def _gconv_flat_kernel(x_ref, w_ref, s_ref, c_ref, o_ref, *, taps, mo):
    """Stride-1 grouped 3x3 conv, one image, one 128-channel pack.

    x_ref: (1, Lp, 128)  flattened zero-padded spatial map of channel pack q
    w_ref: (9, 1, 128, 128) block-diagonal packed tap weights for pack q
    The 9 taps are static pl.ds offsets into the flat spatial dim; no im2col
    tensor is ever materialized in HBM.  Fused BN + ReLU epilogue.
    """
    acc = jnp.dot(x_ref[0, pl.ds(taps[0], mo), :], w_ref[0, 0],
                  preferred_element_type=jnp.float32)
    for t in range(1, len(taps)):
        acc = acc + jnp.dot(x_ref[0, pl.ds(taps[t], mo), :], w_ref[t, 0],
                            preferred_element_type=jnp.float32)
    y = acc * s_ref[0] + c_ref[0]
    o_ref[0] = jnp.maximum(y, 0.0).astype(o_ref.dtype)


def _gconv_taps_kernel(a_ref, b_ref, s_ref, c_ref, o_ref, acc_ref):
    """Stride-2 grouped 3x3 conv step (im2col path): one channel pack, one tap."""
    t = pl.program_id(2)
    d = jnp.dot(a_ref[0], b_ref[0, 0], preferred_element_type=jnp.float32)

    @pl.when(t == 0)
    def _():
        acc_ref[...] = d

    @pl.when(t > 0)
    def _():
        acc_ref[...] += d

    @pl.when(t == pl.num_programs(2) - 1)
    def _():
        y = acc_ref[...] * s_ref[0] + c_ref[0]
        o_ref[...] = jnp.maximum(y, 0.0).astype(o_ref.dtype)


def _max_taps_kernel(p_ref, o_ref):
    # p_ref: (9, tr, lanes) window taps -> elementwise max over the 9 taps
    o_ref[...] = jnp.max(p_ref[...], axis=0)


def _gap_kernel(x_ref, o_ref):
    # x_ref: (1, H*W, C) -> (1, 1, C) spatial mean (f32)
    o_ref[...] = jnp.mean(x_ref[...].astype(jnp.float32), axis=1, keepdims=True)


# --------------------------------------------------------------------------
# Pallas wrappers
# --------------------------------------------------------------------------

def matmul_fused(a, b, scale, bias, residual=None, relu=False,
                 out_dtype=jnp.bfloat16, compute_dtype=jnp.bfloat16):
    """(M,K) @ (K,N) with fused per-column scale/bias (+residual) (+ReLU)."""
    M, K = a.shape
    _, N = b.shape
    tm, Mp = _tile_m(M)
    tn, Np = _tile_n(N)
    tk, Kp = _tile_k(K)

    a = a.astype(compute_dtype)
    b = b.astype(compute_dtype)
    if Mp != M or Kp != K:
        a = jnp.pad(a, ((0, Mp - M), (0, Kp - K)))
    if Kp != K or Np != N:
        b = jnp.pad(b, ((0, Kp - K), (0, Np - N)))
    scale = scale.astype(jnp.float32)
    bias = bias.astype(jnp.float32)
    if Np != N:
        scale = jnp.pad(scale, ((0, 0), (0, Np - N)))
        bias = jnp.pad(bias, ((0, 0), (0, Np - N)))

    nk = Kp // tk
    if nk == 1:
        in_specs = [
            pl.BlockSpec((tm, tk), lambda i, j: (i, 0)),
            pl.BlockSpec((tk, tn), lambda i, j: (0, j)),
            pl.BlockSpec((1, tn), lambda i, j: (0, j)),
            pl.BlockSpec((1, tn), lambda i, j: (0, j)),
        ]
        args = [a, b, scale, bias]
        if residual is not None:
            r = residual.astype(compute_dtype)
            if Mp != M or Np != N:
                r = jnp.pad(r, ((0, Mp - M), (0, Np - N)))
            in_specs.append(pl.BlockSpec((tm, tn), lambda i, j: (i, j)))
            args.append(r)
            kernel = _mm_bn_res_single_kernel
        else:
            kernel = functools.partial(_mm_bn_single_kernel, relu=relu)
        out = pl.pallas_call(
            kernel,
            out_shape=jax.ShapeDtypeStruct((Mp, Np), out_dtype),
            grid_spec=pltpu.PrefetchScalarGridSpec(
                num_scalar_prefetch=0,
                grid=(Mp // tm, Np // tn),
                in_specs=in_specs,
                out_specs=pl.BlockSpec((tm, tn), lambda i, j: (i, j)),
            ),
            compiler_params=pltpu.CompilerParams(
                dimension_semantics=("parallel", "parallel")),
        )(*args)
    else:
        in_specs = [
            pl.BlockSpec((tm, tk), lambda i, j, k: (i, k)),
            pl.BlockSpec((tk, tn), lambda i, j, k: (k, j)),
            pl.BlockSpec((1, tn), lambda i, j, k: (0, j)),
            pl.BlockSpec((1, tn), lambda i, j, k: (0, j)),
        ]
        args = [a, b, scale, bias]
        if residual is not None:
            r = residual.astype(compute_dtype)
            if Mp != M or Np != N:
                r = jnp.pad(r, ((0, Mp - M), (0, Np - N)))
            in_specs.append(pl.BlockSpec((tm, tn), lambda i, j, k: (i, j)))
            args.append(r)
            kernel = _mm_bn_res_kernel
        else:
            kernel = functools.partial(_mm_bn_kernel, relu=relu)
        out = pl.pallas_call(
            kernel,
            out_shape=jax.ShapeDtypeStruct((Mp, Np), out_dtype),
            grid_spec=pltpu.PrefetchScalarGridSpec(
                num_scalar_prefetch=0,
                grid=(Mp // tm, Np // tn, nk),
                in_specs=in_specs,
                out_specs=pl.BlockSpec((tm, tn), lambda i, j, k: (i, j)),
                scratch_shapes=[pltpu.VMEM((tm, tn), jnp.float32)],
            ),
            compiler_params=pltpu.CompilerParams(
                dimension_semantics=("parallel", "parallel", "arbitrary")),
        )(*args)

    if Mp != M or Np != N:
        out = out[:M, :N]
    return out


def _extract_patches(x, k, stride, pad, pad_value=0.0, tap_leading=False):
    """Window taps of x (N,H,W,C).  Used only for the stem's 7x7 im2col, the
    single maxpool and the 3 stride-2 grouped convs."""
    N, H, W, C = x.shape
    xp = jnp.pad(x, ((0, 0), (pad, pad), (pad, pad), (0, 0)),
                 constant_values=pad_value)
    Ho = (H + 2 * pad - k) // stride + 1
    Wo = (W + 2 * pad - k) // stride + 1
    taps = []
    for i in range(k):
        for j in range(k):
            taps.append(xp[:, i:i + stride * Ho:stride,
                           j:j + stride * Wo:stride, :])
    if tap_leading:
        return jnp.stack(taps, axis=0)
    return jnp.stack(taps, axis=3)


def conv_dense_bn(x, w, k, stride, pad, scale, bias, relu=True):
    """Dense kxk conv (the 7x7 stem) via im2col + fused matmul."""
    N, H, W, C = x.shape
    p = _extract_patches(x, k, stride, pad)            # (N,Ho,Wo,k*k,C)
    Ho, Wo = p.shape[1], p.shape[2]
    A = p.reshape(N * Ho * Wo, k * k * C)
    y = matmul_fused(A, w, scale, bias, relu=relu)
    return y.reshape(N, Ho, Wo, w.shape[1])


def conv1x1_bn(x, w, scale, bias, stride=1, relu=False, residual=None):
    """1x1 conv (optionally strided) with fused BN (+residual) (+ReLU)."""
    if stride > 1:
        # TODO(synk): fold the stride into the BlockSpec index_map instead of
        # materializing the strided slice in HBM (small, 3 call sites).
        x = x[:, ::stride, ::stride, :]
    N, H, W, Cin = x.shape
    M = N * H * W
    Cout = w.shape[1]
    res2 = None if residual is None else residual.reshape(M, Cout)
    y = matmul_fused(x.reshape(M, Cin), w, scale, bias,
                     residual=res2, relu=relu)
    return y.reshape(N, H, W, Cout)


def grouped_conv3x3_s1_bn(x, wbd, scale_q, bias_q):
    """Stride-1 grouped 3x3 conv (groups=32) with fused BN+ReLU, no im2col.

    The zero-padded activation is flattened to (N, Hp*Wp, C); each kernel
    invocation handles one image and one 128-channel pack, generating the
    9 taps as static-offset slices of the flat spatial dim.
    """
    N, H, W, C = x.shape
    Q = wbd.shape[1]
    Hp, Wp = H + 2, W + 2
    Ho, Wo = H, W
    mo = Ho * Wp                                      # incl. 2 garbage cols/row
    xp = jnp.pad(x.astype(jnp.bfloat16), ((0, 0), (1, 1), (1, 1), (0, 0)))
    xf = xp.reshape(N, Hp * Wp, C)
    Lp = _round_up(Hp * Wp + 2, 8)                    # room for the last taps
    if Lp != Hp * Wp:
        xf = jnp.pad(xf, ((0, 0), (0, Lp - Hp * Wp), (0, 0)))
    taps = tuple(di * Wp + dj for di in range(3) for dj in range(3))

    out = pl.pallas_call(
        functools.partial(_gconv_flat_kernel, taps=taps, mo=mo),
        out_shape=jax.ShapeDtypeStruct((N, mo, C), jnp.bfloat16),
        grid_spec=pltpu.PrefetchScalarGridSpec(
            num_scalar_prefetch=0,
            grid=(N, Q),
            in_specs=[
                pl.BlockSpec((1, Lp, 128), lambda n, q: (n, 0, q)),
                pl.BlockSpec((9, 1, 128, 128), lambda n, q: (0, q, 0, 0)),
                pl.BlockSpec((1, 1, 128), lambda n, q: (q, 0, 0)),
                pl.BlockSpec((1, 1, 128), lambda n, q: (q, 0, 0)),
            ],
            out_specs=pl.BlockSpec((1, mo, 128), lambda n, q: (n, 0, q)),
        ),
        compiler_params=pltpu.CompilerParams(
            dimension_semantics=("parallel", "parallel")),
    )(xf, wbd, scale_q, bias_q)
    # drop the 2 garbage columns per output row
    return out.reshape(N, Ho, Wp, C)[:, :, :Wo, :]


def grouped_conv3x3_s2_bn(x, wbd, scale_q, bias_q):
    """Stride-2 grouped 3x3 conv (the 3 layer-entry blocks) via im2col."""
    N, H, W, Cin = x.shape
    T, Q = wbd.shape[0], wbd.shape[1]
    P = _extract_patches(x, 3, 2, 1, tap_leading=True)   # (9,N,Ho,Wo,Cin)
    Ho, Wo = P.shape[2], P.shape[3]
    M = N * Ho * Wo
    A = P.reshape(T, M, Cin)
    tm, Mp = _tile_m(M)
    if Mp != M:
        A = jnp.pad(A, ((0, 0), (0, Mp - M), (0, 0)))

    out = pl.pallas_call(
        _gconv_taps_kernel,
        out_shape=jax.ShapeDtypeStruct((Mp, Cin), jnp.bfloat16),
        grid_spec=pltpu.PrefetchScalarGridSpec(
            num_scalar_prefetch=0,
            grid=(Mp // tm, Q, T),                        # M leading (megacore)
            in_specs=[
                pl.BlockSpec((1, tm, 128), lambda i, q, t: (t, i, q)),
                pl.BlockSpec((1, 1, 128, 128), lambda i, q, t: (t, q, 0, 0)),
                pl.BlockSpec((1, 1, 128), lambda i, q, t: (q, 0, 0)),
                pl.BlockSpec((1, 1, 128), lambda i, q, t: (q, 0, 0)),
            ],
            out_specs=pl.BlockSpec((tm, 128), lambda i, q, t: (i, q)),
            scratch_shapes=[pltpu.VMEM((tm, 128), jnp.float32)],
        ),
        compiler_params=pltpu.CompilerParams(
            dimension_semantics=("parallel", "parallel", "arbitrary")),
    )(A, wbd, scale_q, bias_q)
    if Mp != M:
        out = out[:M]
    return out.reshape(N, Ho, Wo, Cin)


def maxpool_3x3_s2_p1(x):
    N, H, W, C = x.shape
    P = _extract_patches(x, 3, 2, 1, pad_value=-jnp.inf, tap_leading=True)
    Ho, Wo = P.shape[2], P.shape[3]
    M = N * Ho * Wo
    total = M * C
    if total % 128 == 0:
        lanes, R = 128, total // 128                   # lane-dense (C=64 folded)
    else:
        lanes, R = C, M
    P2 = P.reshape(9, R, lanes)
    tr, Rp = _tile_m(R)
    if Rp != R:
        P2 = jnp.pad(P2, ((0, 0), (0, Rp - R), (0, 0)))
    y = pl.pallas_call(
        _max_taps_kernel,
        out_shape=jax.ShapeDtypeStruct((Rp, lanes), x.dtype),
        grid_spec=pltpu.PrefetchScalarGridSpec(
            num_scalar_prefetch=0,
            grid=(Rp // tr,),
            in_specs=[pl.BlockSpec((9, tr, lanes), lambda i: (0, i, 0))],
            out_specs=pl.BlockSpec((tr, lanes), lambda i: (i, 0)),
        ),
        compiler_params=pltpu.CompilerParams(
            dimension_semantics=("parallel",)),
    )(P2)
    if Rp != R:
        y = y[:R]
    return y.reshape(N, Ho, Wo, C)


def global_avg_pool(x):
    N, H, W, C = x.shape
    x3 = x.reshape(N, H * W, C)
    y = pl.pallas_call(
        _gap_kernel,
        out_shape=jax.ShapeDtypeStruct((N, 1, C), jnp.float32),
        grid_spec=pltpu.PrefetchScalarGridSpec(
            num_scalar_prefetch=0,
            grid=(N,),
            in_specs=[pl.BlockSpec((1, H * W, C), lambda n: (n, 0, 0))],
            out_specs=pl.BlockSpec((1, 1, C), lambda n: (n, 0, 0)),
        ),
        compiler_params=pltpu.CompilerParams(
            dimension_semantics=("parallel",)),
    )(x3)
    return y.reshape(N, C)


# --------------------------------------------------------------------------
# Parameter construction (deterministic synthetic init, no checkpoint load)
# --------------------------------------------------------------------------

def _dense_w(key, cin, cout, k=1):
    """Dense conv weight as a matmul operand (k*k*cin, cout), K order (ki,kj,cin)."""
    std = (2.0 / (cin * k * k)) ** 0.5
    w = jax.random.normal(key, (k * k * cin, cout), jnp.float32) * std
    return w.astype(jnp.bfloat16)


def _grouped_w(key, cin, cout, k, groups):
    cpg, opg = cin // groups, cout // groups
    std = (2.0 / (cpg * k * k)) ** 0.5
    return jax.random.normal(key, (groups, k * k * cpg, opg), jnp.float32) * std


def _pack_grouped_weight(w, k, n_lanes=128):
    """(G, k*k*cpg, opg) grouped weight -> (k*k, Q, 128, 128) block-diagonal
    packed weight; 128/opg groups per pack, Q = G*opg/128 packs."""
    G, kk_cpg, opg = w.shape
    kk = k * k
    cpg = kk_cpg // kk
    g_pack = n_lanes // opg
    assert G % g_pack == 0 and g_pack * cpg == n_lanes, "unsupported group shape"
    Q = G // g_pack
    w = w.reshape(G, kk, cpg, opg).transpose(1, 0, 2, 3)       # (t, g, c, o)
    w = w.reshape(kk, Q, g_pack, cpg, opg)                     # (t, q, gl, c, o)
    eye = jnp.eye(g_pack, dtype=w.dtype)
    wbd = jnp.einsum('tqgco,gh->tqgcho', w, eye)               # block diagonal
    wbd = wbd.reshape(kk, Q, g_pack * cpg, g_pack * opg)
    return wbd.astype(jnp.bfloat16)


def _bn(c, eps=1e-5):
    # gamma=1, beta=0, running_mean=0, running_var=1 folded to scale/bias.
    scale = jnp.full((1, c), 1.0 / (1.0 + eps) ** 0.5, jnp.float32)
    bias = jnp.zeros((1, c), jnp.float32)
    return scale, bias


def init_params(key, in_channels=3, n_classes=5):
    keys = iter(jax.random.split(key, 256))
    groups, base_width = 32, 4
    s1, b1 = _bn(64)
    params = {
        'conv1_w': _dense_w(next(keys), in_channels, 64, k=7),
        'bn1_scale': s1, 'bn1_bias': b1,
    }
    inplanes = 64
    layer_cfg = [('layer1', 64, 3, 1), ('layer2', 128, 4, 2),
                 ('layer3', 256, 6, 2), ('layer4', 512, 3, 2)]
    for name, planes, nblocks, stride in layer_cfg:
        width = int(planes * base_width / 64) * groups
        outplanes = planes * 4
        Q = width // 128
        blocks = []
        for bi in range(nblocks):
            s = stride if bi == 0 else 1
            s1_, b1_ = _bn(width)
            s2_, b2_ = _bn(width)
            s3_, b3_ = _bn(outplanes)
            blk = {
                'conv1_w': _dense_w(next(keys), inplanes, width),
                'bn1_scale': s1_, 'bn1_bias': b1_,
                'conv2_wbd': _pack_grouped_weight(
                    _grouped_w(next(keys), width, width, 3, groups), 3),
                'bn2_scale': s2_.reshape(Q, 1, 128),
                'bn2_bias': b2_.reshape(Q, 1, 128),
                'conv3_w': _dense_w(next(keys), width, outplanes),
                'bn3_scale': s3_, 'bn3_bias': b3_,
                'stride': s,
            }
            if bi == 0:  # downsample branch (stride != 1 or channel change)
                sd, bd = _bn(outplanes)
                blk['down_w'] = _dense_w(next(keys), inplanes, outplanes)
                blk['down_bn_scale'] = sd
                blk['down_bn_bias'] = bd
            blocks.append(blk)
            inplanes = outplanes
        params[name] = blocks
    params['fc_w'] = (jax.random.normal(next(keys), (2048, n_classes),
                                        jnp.float32) / (2048.0 ** 0.5)
                      ).astype(jnp.bfloat16)
    params['fc_b'] = jnp.zeros((1, n_classes), jnp.float32)
    params['fc_scale'] = jnp.ones((1, n_classes), jnp.float32)
    return params


# --------------------------------------------------------------------------
# Forward pass
# --------------------------------------------------------------------------

def bottleneck(x, p):
    out = conv1x1_bn(x, p['conv1_w'], p['bn1_scale'], p['bn1_bias'], relu=True)
    if p['stride'] == 1:
        out = grouped_conv3x3_s1_bn(out, p['conv2_wbd'],
                                    p['bn2_scale'], p['bn2_bias'])
    else:
        out = grouped_conv3x3_s2_bn(out, p['conv2_wbd'],
                                    p['bn2_scale'], p['bn2_bias'])
    if 'down_w' in p:
        identity = conv1x1_bn(x, p['down_w'], p['down_bn_scale'],
                              p['down_bn_bias'], stride=p['stride'], relu=False)
    else:
        identity = x
    # conv3 1x1 with BN + residual add + ReLU fused in the matmul epilogue
    return conv1x1_bn(out, p['conv3_w'], p['bn3_scale'], p['bn3_bias'],
                      relu=True, residual=identity)


def hemo_resnext50_forward(params, x_nchw):
    # PyTorch gives NCHW; transpose once to NHWC and run the trunk in bf16.
    x = jnp.transpose(x_nchw, (0, 2, 3, 1)).astype(jnp.bfloat16)
    x = conv_dense_bn(x, params['conv1_w'], 7, 2, 3,
                      params['bn1_scale'], params['bn1_bias'], relu=True)
    x = maxpool_3x3_s2_p1(x)
    for name in ('layer1', 'layer2', 'layer3', 'layer4'):
        for blk in params[name]:
            x = bottleneck(x, blk)
    x = global_avg_pool(x)                               # (N, 2048) f32
    # TODO(synk): nn.Dropout(p=0.2) is identity in eval mode; training-mode
    # random masking is not implemented here.
    y = matmul_fused(x, params['fc_w'], params['fc_scale'], params['fc_b'],
                     relu=False, out_dtype=jnp.float32,
                     compute_dtype=jnp.float32)          # f32 classifier head
    return y


if __name__ == "__main__":
    key = jax.random.PRNGKey(0)
    pkey, xkey = jax.random.split(key)
    params = init_params(pkey, in_channels=3, n_classes=5)
    # small but architecture-consistent input (NCHW, like the PyTorch module)
    x = jax.random.normal(xkey, (2, 3, 32, 32), jnp.float32)
    y = hemo_resnext50_forward(params, x)
    y = jax.block_until_ready(y)
    assert y.shape == (2, 5) and bool(jnp.all(jnp.isfinite(y)))
    print("KERNEL_OK")
</pallas_src>

<mosaic_0001>
module attributes {stable_mosaic.version = 11 : i64} {
  func.func @_mm_bn_single_kernel(%arg0: i32, %arg1: i32, %arg2: memref<512x152xbf16, #tpu.memory_space<vmem>>, %arg3: memref<152x64xbf16, #tpu.memory_space<vmem>>, %arg4: memref<1x64xf32, #tpu.memory_space<vmem>>, %arg5: memref<1x64xf32, #tpu.memory_space<vmem>>, %arg6: memref<512x64xbf16, #tpu.memory_space<vmem>>) attributes {dimension_semantics = [#tpu.dimension_semantics<parallel>, #tpu.dimension_semantics<parallel>], iteration_bounds = array<i64: 1, 1>, scalar_prefetch = 0 : i64, scratch_operands = 0 : i64, tpu.core_type = #tpu.core_type<tc>, window_params = [{transform_indices = @transform_0, window_bounds = array<i64: 512, 152>}, {transform_indices = @transform_1, window_bounds = array<i64: 152, 64>}, {transform_indices = @transform_2, window_bounds = array<i64: 1, 64>}, {transform_indices = @transform_3, window_bounds = array<i64: 1, 64>}, {transform_indices = @transform_4, window_bounds = array<i64: 512, 64>}]} {
    %c0 = arith.constant 0 : index
    %c0_0 = arith.constant 0 : index
    %0 = vector.load %arg2[%c0, %c0_0] : memref<512x152xbf16, #tpu.memory_space<vmem>>, vector<512x152xbf16>
    %c0_1 = arith.constant 0 : index
    %c0_2 = arith.constant 0 : index
    %1 = vector.load %arg3[%c0_1, %c0_2] : memref<152x64xbf16, #tpu.memory_space<vmem>>, vector<152x64xbf16>
    %cst = arith.constant dense<0.000000e+00> : vector<512x64xf32>
    %2 = tpu.matmul %0, %1, %cst {dimension_numbers = #tpu.dot_dimension_numbers<[1], [0], [0], [1], [0, 0, 1, 1], [], []>} : vector<512x152xbf16>, vector<152x64xbf16>, vector<512x64xf32> -> vector<512x64xf32>
    %c0_3 = arith.constant 0 : index
    %c0_4 = arith.constant 0 : index
    %3 = vector.load %arg4[%c0_3, %c0_4] : memref<1x64xf32, #tpu.memory_space<vmem>>, vector<1x64xf32>
    %4 = vector.broadcast %3 : vector<1x64xf32> to vector<512x64xf32>
    %5 = arith.mulf %2, %4 : vector<512x64xf32>
    %c0_5 = arith.constant 0 : index
    %c0_6 = arith.constant 0 : index
    %6 = vector.load %arg5[%c0_5, %c0_6] : memref<1x64xf32, #tpu.memory_space<vmem>>, vector<1x64xf32>
    %7 = vector.broadcast %6 : vector<1x64xf32> to vector<512x64xf32>
    %8 = arith.addf %5, %7 : vector<512x64xf32>
    %cst_7 = arith.constant 0.000000e+00 : f32
    %9 = vector.broadcast %cst_7 : f32 to vector<512x64xf32>
    %10 = arith.maximumf %8, %9 : vector<512x64xf32>
    %11 = arith.truncf %10 : vector<512x64xf32> to vector<512x64xbf16>
    %c0_8 = arith.constant 0 : index
    %c0_9 = arith.constant 0 : index
    %12 = vector.load %arg6[%c0_8, %c0_9] : memref<512x64xbf16, #tpu.memory_space<vmem>>, vector<512x64xbf16>
    tpu.vector_store %arg6[%c0_8, %c0_9], %11 {strides = array<i32>} : memref<512x64xbf16, #tpu.memory_space<vmem>>, vector<512x64xbf16>,
    return
  }
  func.func @transform_0(%arg0: i32, %arg1: i32) -> (i32, i32) {
    %c0_i32 = arith.constant 0 : i32
    %c0_i32_0 = arith.constant 0 : i32
    return %arg0, %c0_i32 : i32, i32
  }
  func.func @transform_1(%arg0: i32, %arg1: i32) -> (i32, i32) {
    %c0_i32 = arith.constant 0 : i32
    %c0_i32_0 = arith.constant 0 : i32
    return %c0_i32, %arg1 : i32, i32
  }
  func.func @transform_2(%arg0: i32, %arg1: i32) -> (i32, i32) {
    %c0_i32 = arith.constant 0 : i32
    %c0_i32_0 = arith.constant 0 : i32
    return %c0_i32, %arg1 : i32, i32
  }
  func.func @transform_3(%arg0: i32, %arg1: i32) -> (i32, i32) {
    %c0_i32 = arith.constant 0 : i32
    %c0_i32_0 = arith.constant 0 : i32
    return %c0_i32, %arg1 : i32, i32
  }
  func.func @transform_4(%arg0: i32, %arg1: i32) -> (i32, i32) {
    %c0_i32 = arith.constant 0 : i32
    return %arg0, %arg1 : i32, i32
  }
}

</mosaic_0001>

<llo_original>
// kernel: tpu_custom_call.1
$region0: #{tpu_custom_call.1}
  #allocation0 [shape = 'u32[]', space=smem, size = 0x4, offset = 0x4, fixed_abs, tag = 'smem constant byte address 0x4 - core index']
  #allocation1 [shape = 'u32[72,128]{1,0:T(1,128)}', space=vmem, size = 0x9000, scoped, tag = 'internal scratch']
  %s0 = inlined_call_operand.vmem [shape: bf16[512,152], index: 0, kind: input, shape index: {}]
  %s1 = inlined_call_operand.vmem [shape: bf16[152,64], index: 1, kind: input, shape index: {}]
  %s2 = inlined_call_operand.vmem [shape: f32[1,64], index: 2, kind: input, shape index: {}]
  %s3 = inlined_call_operand.vmem [shape: f32[1,64], index: 3, kind: input, shape index: {}]
  %s4 = inlined_call_operand.vmem [shape: bf16[512,64], index: 4, kind: output, shape index: {}]
  %s5 = sld [smem:[#allocation0]]
  $region26: #{tpu_custom_call.1} parent=0
    _
  %s7 = ssub.s32 1, %s5
  %s8 = scalar_select 0, %s7, %s5
  // Predicated region
  $region2: #{tpu_custom_call.1} parent=0 // pred_check
    _
  $region3: #{tpu_custom_call.1} parent=0 // pred_check_branch
    %10 = sbr.rel (0) target = $region5
  $region4: #{tpu_custom_call.1} parent=0 // pred_region
    _
  $region5: #{tpu_custom_call.1} parent=0 // pred_fallthru
    _
  // Predicated region
  $region6: #{tpu_custom_call.1} parent=0 // pred_check
    _
  $region7: #{tpu_custom_call.1} parent=0 // pred_check_branch
    %12 = sbr.rel (0) target = $region9
  $region8: #{tpu_custom_call.1} parent=0 // pred_region
    _
  $region9: #{tpu_custom_call.1} parent=0 // pred_fallthru
    _
  // Predicated region
  $region10: #{tpu_custom_call.1} parent=0 // pred_check
    _
  $region11: #{tpu_custom_call.1} parent=0 // pred_check_branch
    %14 = sbr.rel (0) target = $region13
  $region12: #{tpu_custom_call.1} parent=0 // pred_region
    _
  $region13: #{tpu_custom_call.1} parent=0 // pred_fallthru
    _
  // Predicated region
  $region14: #{tpu_custom_call.1} parent=0 // pred_check
    _
  $region15: #{tpu_custom_call.1} parent=0 // pred_check_branch
    %16 = sbr.rel (0) target = $region17
  $region16: #{tpu_custom_call.1} parent=0 // pred_region
    _
  $region17: #{tpu_custom_call.1} parent=0 // pred_fallthru
    _
  %v18 = vld [vmem:[%s0] sm:$0xff]
  %v19 = vld [vmem:[%s0 + $0x8] sm:$0xff]
  %v20 = vld [vmem:[%s0 + $0x10] sm:$0xff]
  %v21 = vld [vmem:[%s0 + $0x18] sm:$0xff]
  %v22 = vld [vmem:[%s0 + $0x20] sm:$0xff]
  %v23 = vld [vmem:[%s0 + $0x28] sm:$0xff]
  %v24 = vld [vmem:[%s0 + $0x30] sm:$0xff]
  %v25 = vld [vmem:[%s0 + $0x38] sm:$0xff]
  %v26 = vld [vmem:[%s0 + $0x40] sm:$0xff]
  %v27 = vld [vmem:[%s0 + $0x48] sm:$0xff]
  %v28 = vld [vmem:[%s0 + $0x50] sm:$0xff]
  %v29 = vld [vmem:[%s0 + $0x58] sm:$0xff]
  %v30 = vld [vmem:[%s0 + $0x60] sm:$0xff]
  %v31 = vld [vmem:[%s0 + $0x68] sm:$0xff]
  %v32 = vld [vmem:[%s0 + $0x70] sm:$0xff]
  %v33 = vld [vmem:[%s0 + $0x78] sm:$0xff]
  %v34 = vld [vmem:[%s0 + $0x80] sm:$0xff]
  %v35 = vld [vmem:[%s0 + $0x88] sm:$0xff]
  %v36 = vld [vmem:[%s0 + $0x90] sm:$0xff]
  %v37 = vld [vmem:[%s0 + $0x98] sm:$0xff]
  %v38 = vld [vmem:[%s0 + $0xa0] sm:$0xff]
  %v39 = vld [vmem:[%s0 + $0xa8] sm:$0xff]
  %v40 = vld [vmem:[%s0 + $0xb0] sm:$0xff]
  %v41 = vld [vmem:[%s0 + $0xb8] sm:$0xff]
  %v42 = vld [vmem:[%s0 + $0xc0] sm:$0xff]
  %v43 = vld [vmem:[%s0 + $0xc8] sm:$0xff]
  %v44 = vld [vmem:[%s0 + $0xd0] sm:$0xff]
  %v45 = vld [vmem:[%s0 + $0xd8] sm:$0xff]
  %v46 = vld [vmem:[%s0 + $0xe0] sm:$0xff]
  %v47 = vld [vmem:[%s0 + $0xe8] sm:$0xff]
  %v48 = vld [vmem:[%s0 + $0xf0] sm:$0xff]
  %v49 = vld [vmem:[%s0 + $0xf8] sm:$0xff]
  %v50 = vld [vmem:[%s0 + $0x100] sm:$0xff]
  %v51 = vld [vmem:[%s0 + $0x108] sm:$0xff]
  %v52 = vld [vmem:[%s0 + $0x110] sm:$0xff]
  %v53 = vld [vmem:[%s0 + $0x118] sm:$0xff]
  %v54 = vld [vmem:[%s0 + $0x120] sm:$0xff]
  %v55 = vld [vmem:[%s0 + $0x128] sm:$0xff]
  %v56 = vld [vmem:[%s0 + $0x130] sm:$0xff]
  %v57 = vld [vmem:[%s0 + $0x138] sm:$0xff]
  %v58 = vld [vmem:[%s0 + $0x140] sm:$0xff]
  %v59 = vld [vmem:[%s0 + $0x148] sm:$0xff]
  %v60 = vld [vmem:[%s0 + $0x150] sm:$0xff]
  %v61 = vld [vmem:[%s0 + $0x158] sm:$0xff]
  %v62 = vld [vmem:[%s0 + $0x160] sm:$0xff]
  %v63 = vld [vmem:[%s0 + $0x168] sm:$0xff]
  %v64 = vld [vmem:[%s0 + $0x170] sm:$0xff]
  %v65 = vld [vmem:[%s0 + $0x178] sm:$0xff]
  %v66 = vld [vmem:[%s0 + $0x180] sm:$0xff]
  %v67 = vld [vmem:[%s0 + $0x188] sm:$0xff]
  %v68 = vld [vmem:[%s0 + $0x190] sm:$0xff]
  %v69 = vld [vmem:[%s0 + $0x198] sm:$0xff]
  %v70 = vld [vmem:[%s0 + $0x1a0] sm:$0xff]
  %v71 = vld [vmem:[%s0 + $0x1a8] sm:$0xff]
  %v72 = vld [vmem:[%s0 + $0x1b0] sm:$0xff]
  %v73 = vld [vmem:[%s0 + $0x1b8] sm:$0xff]
  %v74 = vld [vmem:[%s0 + $0x1c0] sm:$0xff]
  %v75 = vld [vmem:[%s0 + $0x1c8] sm:$0xff]
  %v76 = vld [vmem:[%s0 + $0x1d0] sm:$0xff]
  %v77 = vld [vmem:[%s0 + $0x1d8] sm:$0xff]
  %v78 = vld [vmem:[%s0 + $0x1e0] sm:$0xff]
  %v79 = vld [vmem:[%s0 + $0x1e8] sm:$0xff]
  %v80 = vld [vmem:[%s0 + $0x1f0] sm:$0xff]
  %v81 = vld [vmem:[%s0 + $0x1f8] sm:$0xff]
  %v82 = vld [vmem:[%s1] sm:$0xf]
  %v83 = vld [vmem:[%s1 + $0x4] sm:$0xf]
  %v84 = vld [vmem:[%s1 + $0x8] sm:$0xf]
  %v85 = vld [vmem:[%s1 + $0xc] sm:$0xf]
  %v86 = vld [vmem:[%s1 + $0x10] sm:$0xf]
  %v87 = vld [vmem:[%s1 + $0x14] sm:$0xf]
  %v88 = vld [vmem:[%s1 + $0x18] sm:$0xf]
  %v89 = vld [vmem:[%s1 + $0x1c] sm:$0xf]
  %v90 = vld [vmem:[%s1 + $0x20] sm:$0xf]
  %v91 = vld [vmem:[%s1 + $0x24] sm:$0xf]
  %v92 = vld [vmem:[%s1 + $0x28] sm:$0xf]
  %v93 = vld [vmem:[%s1 + $0x2c] sm:$0xf]
  %v94 = vld [vmem:[%s1 + $0x30] sm:$0xf]
  %v95 = vld [vmem:[%s1 + $0x34] sm:$0xf]
  %v96 = vld [vmem:[%s1 + $0x38] sm:$0xf]
  %v97 = vld [vmem:[%s1 + $0x3c] sm:$0xf]
  %v98 = vld [vmem:[%s1 + $0x40] sm:$0xf]
  %v99 = vld [vmem:[%s1 + $0x44] sm:$0xf]
  %v100 = vld [vmem:[%s1 + $0x48] sm:$0xf]
  %v165 = vunpack.c.l.b16 %v18
  %v166 = vunpack.c.h.b16 %v18
  %v167 = vunpack.c.l.b16 %v19
  %v168 = vunpack.c.h.b16 %v19
  %v169 = vunpack.c.l.b16 %v20
  %v170 = vunpack.c.h.b16 %v20
  %v171 = vunpack.c.l.b16 %v21
  %v172 = vunpack.c.h.b16 %v21
  %v173 = vunpack.c.l.b16 %v22
  %v174 = vunpack.c.h.b16 %v22
  %v175 = vunpack.c.l.b16 %v23
  %v176 = vunpack.c.h.b16 %v23
  %v177 = vunpack.c.l.b16 %v24
  %v178 = vunpack.c.h.b16 %v24
  %v179 = vunpack.c.l.b16 %v25
  %v180 = vunpack.c.h.b16 %v25
  %v181 = vunpack.c.l.b16 %v26
  %v182 = vunpack.c.h.b16 %v26
  %v183 = vunpack.c.l.b16 %v27
  %v184 = vunpack.c.h.b16 %v27
  %v185 = vunpack.c.l.b16 %v28
  %v186 = vunpack.c.h.b16 %v28
  %v187 = vunpack.c.l.b16 %v29
  %v188 = vunpack.c.h.b16 %v29
  %v189 = vunpack.c.l.b16 %v30
  %v190 = vunpack.c.h.b16 %v30
  %v191 = vunpack.c.l.b16 %v31
  %v192 = vunpack.c.h.b16 %v31
  %v193 = vunpack.c.l.b16 %v32
  %v194 = vunpack.c.h.b16 %v32
  %v195 = vunpack.c.l.b16 %v33
  %v196 = vunpack.c.h.b16 %v33
  %v197 = vunpack.c.l.b16 %v34
  %v198 = vunpack.c.h.b16 %v34
  %v199 = vunpack.c.l.b16 %v35
  %v200 = vunpack.c.h.b16 %v35
  %v201 = vunpack.c.l.b16 %v36
  %v202 = vunpack.c.h.b16 %v36
  %v203 = vunpack.c.l.b16 %v37
  %v204 = vunpack.c.h.b16 %v37
  %v205 = vunpack.c.l.b16 %v38
  %v206 = vunpack.c.h.b16 %v38
  %v207 = vunpack.c.l.b16 %v39
  %v208 = vunpack.c.h.b16 %v39
  %v209 = vunpack.c.l.b16 %v40
  %v210 = vunpack.c.h.b16 %v40
  %v211 = vunpack.c.l.b16 %v41
  %v212 = vunpack.c.h.b16 %v41
  %v213 = vunpack.c.l.b16 %v42
  %v214 = vunpack.c.h.b16 %v42
  %v215 = vunpack.c.l.b16 %v43
  %v216 = vunpack.c.h.b16 %v43
  %v217 = vunpack.c.l.b16 %v44
  %v218 = vunpack.c.h.b16 %v44
  %v219 = vunpack.c.l.b16 %v45
  %v220 = vunpack.c.h.b16 %v45
  %v221 = vunpack.c.l.b16 %v46
  %v222 = vunpack.c.h.b16 %v46
  %v223 = vunpack.c.l.b16 %v47
  %v224 = vunpack.c.h.b16 %v47
  %v225 = vunpack.c.l.b16 %v48
  %v226 = vunpack.c.h.b16 %v48
  %v227 = vunpack.c.l.b16 %v49
  %v228 = vunpack.c.h.b16 %v49
  %v229 = vunpack.c.l.b16 %v50
  %v230 = vunpack.c.h.b16 %v50
  %v231 = vunpack.c.l.b16 %v51
  %v232 = vunpack.c.h.b16 %v51
  %v233 = vunpack.c.l.b16 %v52
  %v234 = vunpack.c.h.b16 %v52
  %v235 = vunpack.c.l.b16 %v53
  %v236 = vunpack.c.h.b16 %v53
  %v237 = vunpack.c.l.b16 %v54
  %v238 = vunpack.c.h.b16 %v54
  %v239 = vunpack.c.l.b16 %v55
  %v240 = vunpack.c.h.b16 %v55
  %v241 = vunpack.c.l.b16 %v56
  %v242 = vunpack.c.h.b16 %v56
  %v243 = vunpack.c.l.b16 %v57
  %v244 = vunpack.c.h.b16 %v57
  %v245 = vunpack.c.l.b16 %v58
  %v246 = vunpack.c.h.b16 %v58
  %v247 = vunpack.c.l.b16 %v59
  %v248 = vunpack.c.h.b16 %v59
  %v249 = vunpack.c.l.b16 %v60
  %v250 = vunpack.c.h.b16 %v60
  %v251 = vunpack.c.l.b16 %v61
  %v252 = vunpack.c.h.b16 %v61
  %v253 = vunpack.c.l.b16 %v62
  %v254 = vunpack.c.h.b16 %v62
  %v255 = vunpack.c.l.b16 %v63
  %v256 = vunpack.c.h.b16 %v63
  %v257 = vunpack.c.l.b16 %v64
  %v258 = vunpack.c.h.b16 %v64
  %v259 = vunpack.c.l.b16 %v65
  %v260 = vunpack.c.h.b16 %v65
  %v261 = vunpack.c.l.b16 %v66
  %v262 = vunpack.c.h.b16 %v66
  %v263 = vunpack.c.l.b16 %v67
  %v264 = vunpack.c.h.b16 %v67
  %v265 = vunpack.c.l.b16 %v68
  %v266 = vunpack.c.h.b16 %v68
  %v267 = vunpack.c.l.b16 %v69
  %v268 = vunpack.c.h.b16 %v69
  %v269 = vunpack.c.l.b16 %v70
  %v270 = vunpack.c.h.b16 %v70
  %v271 = vunpack.c.l.b16 %v71
  %v272 = vunpack.c.h.b16 %v71
  %v273 = vunpack.c.l.b16 %v72
  %v274 = vunpack.c.h.b16 %v72
  %v275 = vunpack.c.l.b16 %v73
  %v276 = vunpack.c.h.b16 %v73
  %v277 = vunpack.c.l.b16 %v74
  %v278 = vunpack.c.h.b16 %v74
  %v279 = vunpack.c.l.b16 %v75
  %v280 = vunpack.c.h.b16 %v75
  %v281 = vunpack.c.l.b16 %v76
  %v282 = vunpack.c.h.b16 %v76
  %v283 = vunpack.c.l.b16 %v77
  %v284 = vunpack.c.h.b16 %v77
  %v285 = vunpack.c.l.b16 %v78
  %v286 = vunpack.c.h.b16 %v78
  %v287 = vunpack.c.l.b16 %v79
  %v288 = vunpack.c.h.b16 %v79
  %v289 = vunpack.c.l.b16 %v80
  %v290 = vunpack.c.h.b16 %v80
  %v291 = vunpack.c.l.b16 %v81
  %v292 = vunpack.c.h.b16 %v81
  %v293 = vpack.c.b16 %v167, %v165
  %v294 = vpack.c.b16 %v168, %v166
  %v295 = vpack.c.b16 %v171, %v169
  %v296 = vpack.c.b16 %v172, %v170
  %v297 = vpack.c.b16 %v175, %v173
  %v298 = vpack.c.b16 %v176, %v174
  %v299 = vpack.c.b16 %v179, %v177
  %v300 = vpack.c.b16 %v180, %v178
  %v301 = vpack.c.b16 %v183, %v181
  %v302 = vpack.c.b16 %v184, %v182
  %v303 = vpack.c.b16 %v187, %v185
  %v304 = vpack.c.b16 %v188, %v186
  %v305 = vpack.c.b16 %v191, %v189
  %v306 = vpack.c.b16 %v192, %v190
  %v307 = vpack.c.b16 %v195, %v193
  %v308 = vpack.c.b16 %v196, %v194
  %v309 = vpack.c.b16 %v199, %v197
  %v310 = vpack.c.b16 %v200, %v198
  %v311 = vpack.c.b16 %v203, %v201
  %v312 = vpack.c.b16 %v204, %v202
  %v313 = vpack.c.b16 %v207, %v205
  %v314 = vpack.c.b16 %v208, %v206
  %v315 = vpack.c.b16 %v211, %v209
  %v316 = vpack.c.b16 %v212, %v210
  %v317 = vpack.c.b16 %v215, %v213
  %v318 = vpack.c.b16 %v216, %v214
  %v319 = vpack.c.b16 %v219, %v217
  %v320 = vpack.c.b16 %v220, %v218
  %v321 = vpack.c.b16 %v223, %v221
  %v322 = vpack.c.b16 %v224, %v222
  %v323 = vpack.c.b16 %v227, %v225
  %v324 = vpack.c.b16 %v228, %v226
  %v325 = vpack.c.b16 %v231, %v229
  %v326 = vpack.c.b16 %v232, %v230
  %v327 = vpack.c.b16 %v235, %v233
  %v328 = vpack.c.b16 %v236, %v234
  %v329 = vpack.c.b16 %v239, %v237
  %v330 = vpack.c.b16 %v240, %v238
  %v331 = vpack.c.b16 %v243, %v241
  %v332 = vpack.c.b16 %v244, %v242
  %v333 = vpack.c.b16 %v247, %v245
  %v334 = vpack.c.b16 %v248, %v246
  %v335 = vpack.c.b16 %v251, %v249
  %v336 = vpack.c.b16 %v252, %v250
  %v337 = vpack.c.b16 %v255, %v253
  %v338 = vpack.c.b16 %v256, %v254
  %v339 = vpack.c.b16 %v259, %v257
  %v340 = vpack.c.b16 %v260, %v258
  %v341 = vpack.c.b16 %v263, %v261
  %v342 = vpack.c.b16 %v264, %v262
  %v343 = vpack.c.b16 %v267, %v265
  %v344 = vpack.c.b16 %v268, %v266
  %v345 = vpack.c.b16 %v271, %v269
  %v346 = vpack.c.b16 %v272, %v270
  %v347 = vpack.c.b16 %v275, %v273
  %v348 = vpack.c.b16 %v276, %v274
  %v349 = vpack.c.b16 %v279, %v277
  %v350 = vpack.c.b16 %v280, %v278
  %v351 = vpack.c.b16 %v283, %v281
  %v352 = vpack.c.b16 %v284, %v282
  %v353 = vpack.c.b16 %v287, %v285
  %v354 = vpack.c.b16 %v288, %v286
  %v355 = vpack.c.b16 %v291, %v289
  %v356 = vpack.c.b16 %v292, %v290
  %v408 = vunpack.c.l.b16 %v82
  %v409 = vunpack.c.l.b16 %v83
  %v410 = vunpack.c.l.b16 %v84
  %v411 = vunpack.c.l.b16 %v85
  %v412 = vunpack.c.l.b16 %v86
  %v413 = vunpack.c.l.b16 %v87
  %v414 = vunpack.c.l.b16 %v88
  %v415 = vunpack.c.l.b16 %v89
  %v416 = vunpack.c.l.b16 %v90
  %v417 = vunpack.c.l.b16 %v91
  %v418 = vunpack.c.l.b16 %v92
  %v419 = vunpack.c.l.b16 %v93
  %v420 = vunpack.c.l.b16 %v94
  %v421 = vunpack.c.l.b16 %v95
  %v422 = vunpack.c.l.b16 %v96
  %v423 = vunpack.c.l.b16 %v97
  %v424 = vunpack.c.l.b16 %v98
  %v425 = vunpack.c.l.b16 %v99
  %v426 = vunpack.c.l.b16 %v100
  %v427 = vpack.c.b16 %v409, %v408
  %v428 = vpack.c.b16 %v411, %v410
  %v429 = vpack.c.b16 %v413, %v412
  %v430 = vpack.c.b16 %v415, %v414
  %v431 = vpack.c.b16 %v417, %v416
  %v432 = vpack.c.b16 %v419, %v418
  %v433 = vpack.c.b16 %v421, %v420
  %v434 = vpack.c.b16 %v423, %v422
  %v435 = vpack.c.b16 %v425, %v424
  %v436 = vpack.c.b16 %v426, %v426
  %vm446 = vcmask 195584
  %v448 = vsel %vm446, %v294, 0
  %v451 = vsel %vm446, %v296, 0
  %v454 = vsel %vm446, %v298, 0
  %v457 = vsel %vm446, %v300, 0
  %v460 = vsel %vm446, %v302, 0
  %v463 = vsel %vm446, %v304, 0
  %v466 = vsel %vm446, %v306, 0
  %v469 = vsel %vm446, %v308, 0
  %v472 = vsel %vm446, %v310, 0
  %v475 = vsel %vm446, %v312, 0
  %v478 = vsel %vm446, %v314, 0
  %v481 = vsel %vm446, %v316, 0
  %v484 = vsel %vm446, %v318, 0
  %v487 = vsel %vm446, %v320, 0
  %v490 = vsel %vm446, %v322, 0
  %v493 = vsel %vm446, %v324, 0
  %v496 = vsel %vm446, %v326, 0
  %v499 = vsel %vm446, %v328, 0
  %v502 = vsel %vm446, %v330, 0
  %v505 = vsel %vm446, %v332, 0
  %v508 = vsel %vm446, %v334, 0
  %v511 = vsel %vm446, %v336, 0
  %v514 = vsel %vm446, %v338, 0
  %v517 = vsel %vm446, %v340, 0
  %v520 = vsel %vm446, %v342, 0
  %v523 = vsel %vm446, %v344, 0
  %v526 = vsel %vm446, %v346, 0
  %v529 = vsel %vm446, %v348, 0
  %v532 = vsel %vm446, %v350, 0
  %v535 = vsel %vm446, %v352, 0
  %v538 = vsel %vm446, %v354, 0
  %v541 = vsel %vm446, %v356, 0
  %vm543 = vcmask 1043456
  %v545 = vsel %vm543, %v436, 0
  %547 = vmatpush.bf16.msra.mxu0 %v434
  %548 = vmatpush.bf16.msra.mxu0 %v433
  %549 = vmatpush.bf16.msra.mxu0 %v432
  %550 = vmatpush.bf16.msra.mxu0 %v431
  %551 = vmatpush.bf16.msra.mxu0 %v430
  %552 = vmatpush.bf16.msra.mxu0 %v429
  %553 = vmatpush.bf16.msra.mxu0 %v428
  %554 = vmatpush.bf16.msra.mxu0 %v427
  %555 = vmatmul.bf16.gmra.mxu0 %v293
  %v556 = vpop.f32.mrf.mxu0
  %v557 = vadd.f32 0.0, %v556
  %v558 = vpop.f32.mrf.mxu0
  %v559 = vadd.f32 0.0, %v558
  %560 = vmatmul.bf16.gmra.mxu0 %v295
  %v561 = vpop.f32.mrf.mxu0
  %v562 = vadd.f32 0.0, %v561
  %v563 = vpop.f32.mrf.mxu0
  %v564 = vadd.f32 0.0, %v563
  %565 = vmatmul.bf16.gmra.mxu0 %v297
  %v566 = vpop.f32.mrf.mxu0
  %v567 = vadd.f32 0.0, %v566
  %v568 = vpop.f32.mrf.mxu0
  %v569 = vadd.f32 0.0, %v568
  %570 = vmatmul.bf16.gmra.mxu0 %v299
  %v571 = vpop.f32.mrf.mxu0
  %v572 = vadd.f32 0.0, %v571
  %v573 = vpop.f32.mrf.mxu0
  %v574 = vadd.f32 0.0, %v573
  %575 = vmatmul.bf16.gmra.mxu0 %v301
  %v576 = vpop.f32.mrf.mxu0
  %v577 = vadd.f32 0.0, %v576
  %v578 = vpop.f32.mrf.mxu0
  %v579 = vadd.f32 0.0, %v578
  %580 = vmatmul.bf16.gmra.mxu0 %v303
  %v581 = vpop.f32.mrf.mxu0
  %v582 = vadd.f32 0.0, %v581
  %v583 = vpop.f32.mrf.mxu0
  %v584 = vadd.f32 0.0, %v583
  %585 = vmatmul.bf16.gmra.mxu0 %v305
  %v586 = vpop.f32.mrf.mxu0
  %v587 = vadd.f32 0.0, %v586
  %v588 = vpop.f32.mrf.mxu0
  %v589 = vadd.f32 0.0, %v588
  %590 = vmatmul.bf16.gmra.mxu0 %v307
  %v591 = vpop.f32.mrf.mxu0
  %v592 = vadd.f32 0.0, %v591
  %v593 = vpop.f32.mrf.mxu0
  %v594 = vadd.f32 0.0, %v593
  %595 = vmatmul.bf16.gmra.mxu0 %v309
  %v596 = vpop.f32.mrf.mxu0
  %v597 = vadd.f32 0.0, %v596
  %v598 = vpop.f32.mrf.mxu0
  %v599 = vadd.f32 0.0, %v598
  %600 = vmatmul.bf16.gmra.mxu0 %v311
  %v601 = vpop.f32.mrf.mxu0
  %v602 = vadd.f32 0.0, %v601
  %v603 = vpop.f32.mrf.mxu0
  %v604 = vadd.f32 0.0, %v603
  %605 = vmatmul.bf16.gmra.mxu0 %v313
  %v606 = vpop.f32.mrf.mxu0
  %v607 = vadd.f32 0.0, %v606
  %v608 = vpop.f32.mrf.mxu0
  %v609 = vadd.f32 0.0, %v608
  %610 = vmatmul.bf16.gmra.mxu0 %v315
  %v611 = vpop.f32.mrf.mxu0
  %v612 = vadd.f32 0.0, %v611
  %v613 = vpop.f32.mrf.mxu0
  %v614 = vadd.f32 0.0, %v613
  %615 = vmatmul.bf16.gmra.mxu0 %v317
  %v616 = vpop.f32.mrf.mxu0
  %v617 = vadd.f32 0.0, %v616
  %v618 = vpop.f32.mrf.mxu0
  %v619 = vadd.f32 0.0, %v618
  %620 = vmatmul.bf16.gmra.mxu0 %v319
  %v621 = vpop.f32.mrf.mxu0
  %v622 = vadd.f32 0.0, %v621
  %v623 = vpop.f32.mrf.mxu0
  %v624 = vadd.f32 0.0, %v623
  %625 = vmatmul.bf16.gmra.mxu0 %v321
  %v626 = vpop.f32.mrf.mxu0
  %v627 = vadd.f32 0.0, %v626
  %v628 = vpop.f32.mrf.mxu0
  %v629 = vadd.f32 0.0, %v628
  %630 = vmatmul.bf16.gmra.mxu0 %v323
  %v631 = vpop.f32.mrf.mxu0
  %v632 = vadd.f32 0.0, %v631
  %v633 = vpop.f32.mrf.mxu0
  %v634 = vadd.f32 0.0, %v633
  %635 = vmatmul.bf16.gmra.mxu0 %v325
  %v636 = vpop.f32.mrf.mxu0
  %v637 = vadd.f32 0.0, %v636
  %v638 = vpop.f32.mrf.mxu0
  %v639 = vadd.f32 0.0, %v638
  %640 = vmatmul.bf16.gmra.mxu0 %v327
  %v641 = vpop.f32.mrf.mxu0
  %v642 = vadd.f32 0.0, %v641
  %v643 = vpop.f32.mrf.mxu0
  %v644 = vadd.f32 0.0, %v643
  %645 = vmatmul.bf16.gmra.mxu0 %v329
  %v646 = vpop.f32.mrf.mxu0
  %v647 = vadd.f32 0.0, %v646
  %v648 = vpop.f32.mrf.mxu0
  %v649 = vadd.f32 0.0, %v648
  %650 = vmatmul.bf16.gmra.mxu0 %v331
  %v651 = vpop.f32.mrf.mxu0
  %v652 = vadd.f32 0.0, %v651
  %v653 = vpop.f32.mrf.mxu0
  %v654 = vadd.f32 0.0, %v653
  %655 = vmatmul.bf16.gmra.mxu0 %v333
  %v656 = vpop.f32.mrf.mxu0
  %v657 = vadd.f32 0.0, %v656
  %v658 = vpop.f32.mrf.mxu0
  %v659 = vadd.f32 0.0, %v658
  %660 = vmatmul.bf16.gmra.mxu0 %v335
  %v661 = vpop.f32.mrf.mxu0
  %v662 = vadd.f32 0.0, %v661
  %v663 = vpop.f32.mrf.mxu0
  %v664 = vadd.f32 0.0, %v663
  %665 = vmatmul.bf16.gmra.mxu0 %v337
  %v666 = vpop.f32.mrf.mxu0
  %v667 = vadd.f32 0.0, %v666
  %v668 = vpop.f32.mrf.mxu0
  %v669 = vadd.f32 0.0, %v668
  %670 = vmatmul.bf16.gmra.mxu0 %v339
  %v671 = vpop.f32.mrf.mxu0
  %v672 = vadd.f32 0.0, %v671
  %v673 = vpop.f32.mrf.mxu0
  %v674 = vadd.f32 0.0, %v673
  %675 = vmatmul.bf16.gmra.mxu0 %v341
  %v676 = vpop.f32.mrf.mxu0
  %v677 = vadd.f32 0.0, %v676
  %v678 = vpop.f32.mrf.mxu0
  %v679 = vadd.f32 0.0, %v678
  %680 = vmatmul.bf16.gmra.mxu0 %v343
  %v681 = vpop.f32.mrf.mxu0
  %v682 = vadd.f32 0.0, %v681
  %v683 = vpop.f32.mrf.mxu0
  %v684 = vadd.f32 0.0, %v683
  %685 = vmatmul.bf16.gmra.mxu0 %v345
  %v686 = vpop.f32.mrf.mxu0
  %v687 = vadd.f32 0.0, %v686
  %v688 = vpop.f32.mrf.mxu0
  %v689 = vadd.f32 0.0, %v688
  %690 = vmatmul.bf16.gmra.mxu0 %v347
  %v691 = vpop.f32.mrf.mxu0
  %v692 = vadd.f32 0.0, %v691
  %v693 = vpop.f32.mrf.mxu0
  %v694 = vadd.f32 0.0, %v693
  %695 = vmatmul.bf16.gmra.mxu0 %v349
  %v696 = vpop.f32.mrf.mxu0
  %v697 = vadd.f32 0.0, %v696
  %v698 = vpop.f32.mrf.mxu0
  %v699 = vadd.f32 0.0, %v698
  %700 = vmatmul.bf16.gmra.mxu0 %v351
  %v701 = vpop.f32.mrf.mxu0
  %v702 = vadd.f32 0.0, %v701
  %v703 = vpop.f32.mrf.mxu0
  %v704 = vadd.f32 0.0, %v703
  %705 = vmatmul.bf16.gmra.mxu0 %v353
  %v706 = vpop.f32.mrf.mxu0
  %v707 = vadd.f32 0.0, %v706
  %v708 = vpop.f32.mrf.mxu0
  %v709 = vadd.f32 0.0, %v708
  %710 = vmatmul.bf16.gmra.mxu0 %v355
  %v711 = vpop.f32.mrf.mxu0
  %v712 = vadd.f32 0.0, %v711
  %v713 = vpop.f32.mrf.mxu0
  %v714 = vadd.f32 0.0, %v713
  %715 = vdwg.mxu0
  %716 = vmatpush.bf16.msra.mxu0 0
  %717 = vmatpush.bf16.msra.mxu0 0
  %718 = vmatpush.bf16.msra.mxu0 0
  %719 = vmatpush.bf16.msra.mxu0 0
  %720 = vmatpush.bf16.msra.mxu0 0
  %721 = vmatpush.bf16.msra.mxu0 0
  %722 = vmatpush.bf16.msra.mxu0 %v545
  %723 = vmatpush.bf16.msra.mxu0 %v435
  %724 = vmatmul.bf16.gmra.mxu0 %v448
  %v725 = vpop.f32.mrf.mxu0
  %v726 = vadd.f32 %v557, %v725
  %v727 = vpop.f32.mrf.mxu0
  %v728 = vadd.f32 %v559, %v727
  %729 = vmatmul.bf16.gmra.mxu0 %v451
  %v730 = vpop.f32.mrf.mxu0
  %v731 = vadd.f32 %v562, %v730
  %v732 = vpop.f32.mrf.mxu0
  %v733 = vadd.f32 %v564, %v732
  %734 = vmatmul.bf16.gmra.mxu0 %v454
  %v735 = vpop.f32.mrf.mxu0
  %v736 = vadd.f32 %v567, %v735
  %v737 = vpop.f32.mrf.mxu0
  %v738 = vadd.f32 %v569, %v737
  %739 = vmatmul.bf16.gmra.mxu0 %v457
  %v740 = vpop.f32.mrf.mxu0
  %v741 = vadd.f32 %v572, %v740
  %v742 = vpop.f32.mrf.mxu0
  %v743 = vadd.f32 %v574, %v742
  %744 = vmatmul.bf16.gmra.mxu0 %v460
  %v745 = vpop.f32.mrf.mxu0
  %v746 = vadd.f32 %v577, %v745
  %v747 = vpop.f32.mrf.mxu0
  %v748 = vadd.f32 %v579, %v747
  %749 = vmatmul.bf16.gmra.mxu0 %v463
  %v750 = vpop.f32.mrf.mxu0
  %v751 = vadd.f32 %v582, %v750
  %v752 = vpop.f32.mrf.mxu0
  %v753 = vadd.f32 %v584, %v752
  %754 = vmatmul.bf16.gmra.mxu0 %v466
  %v755 = vpop.f32.mrf.mxu0
  %v756 = vadd.f32 %v587, %v755
  %v757 = vpop.f32.mrf.mxu0
  %v758 = vadd.f32 %v589, %v757
  %759 = vmatmul.bf16.gmra.mxu0 %v469
  %v760 = vpop.f32.mrf.mxu0
  %v761 = vadd.f32 %v592, %v760
  %v762 = vpop.f32.mrf.mxu0
  %v763 = vadd.f32 %v594, %v762
  %764 = vmatmul.bf16.gmra.mxu0 %v472
  %v765 = vpop.f32.mrf.mxu0
  %v766 = vadd.f32 %v597, %v765
  %v767 = vpop.f32.mrf.mxu0
  %v768 = vadd.f32 %v599, %v767
  %769 = vmatmul.bf16.gmra.mxu0 %v475
  %v770 = vpop.f32.mrf.mxu0
  %v771 = vadd.f32 %v602, %v770
  %v772 = vpop.f32.mrf.mxu0
  %v773 = vadd.f32 %v604, %v772
  %774 = vmatmul.bf16.gmra.mxu0 %v478
  %v775 = vpop.f32.mrf.mxu0
  %v776 = vadd.f32 %v607, %v775
  %v777 = vpop.f32.mrf.mxu0
  %v778 = vadd.f32 %v609, %v777
  %779 = vmatmul.bf16.gmra.mxu0 %v481
  %v780 = vpop.f32.mrf.mxu0
  %v781 = vadd.f32 %v612, %v780
  %v782 = vpop.f32.mrf.mxu0
  %v783 = vadd.f32 %v614, %v782
  %784 = vmatmul.bf16.gmra.mxu0 %v484
  %v785 = vpop.f32.mrf.mxu0
  %v786 = vadd.f32 %v617, %v785
  %v787 = vpop.f32.mrf.mxu0
  %v788 = vadd.f32 %v619, %v787
  %789 = vmatmul.bf16.gmra.mxu0 %v487
  %v790 = vpop.f32.mrf.mxu0
  %v791 = vadd.f32 %v622, %v790
  %v792 = vpop.f32.mrf.mxu0
  %v793 = vadd.f32 %v624, %v792
  %794 = vmatmul.bf16.gmra.mxu0 %v490
  %v795 = vpop.f32.mrf.mxu0
  %v796 = vadd.f32 %v627, %v795
  %v797 = vpop.f32.mrf.mxu0
  %v798 = vadd.f32 %v629, %v797
  %799 = vmatmul.bf16.gmra.mxu0 %v493
  %v800 = vpop.f32.mrf.mxu0
  %v801 = vadd.f32 %v632, %v800
  %v802 = vpop.f32.mrf.mxu0
  %v803 = vadd.f32 %v634, %v802
  %804 = vmatmul.bf16.gmra.mxu0 %v496
  %v805 = vpop.f32.mrf.mxu0
  %v806 = vadd.f32 %v637, %v805
  %v807 = vpop.f32.mrf.mxu0
  %v808 = vadd.f32 %v639, %v807
  %809 = vmatmul.bf16.gmra.mxu0 %v499
  %v810 = vpop.f32.mrf.mxu0
  %v811 = vadd.f32 %v642, %v810
  %v812 = vpop.f32.mrf.mxu0
  %v813 = vadd.f32 %v644, %v812
  %814 = vmatmul.bf16.gmra.mxu0 %v502
  %v815 = vpop.f32.mrf.mxu0
  %v816 = vadd.f32 %v647, %v815
  %v817 = vpop.f32.mrf.mxu0
  %v818 = vadd.f32 %v649, %v817
  %819 = vmatmul.bf16.gmra.mxu0 %v505
  %v820 = vpop.f32.mrf.mxu0
  %v821 = vadd.f32 %v652, %v820
  %v822 = vpop.f32.mrf.mxu0
  %v823 = vadd.f32 %v654, %v822
  %824 = vmatmul.bf16.gmra.mxu0 %v508
  %v825 = vpop.f32.mrf.mxu0
  %v826 = vadd.f32 %v657, %v825
  %v827 = vpop.f32.mrf.mxu0
  %v828 = vadd.f32 %v659, %v827
  %829 = vmatmul.bf16.gmra.mxu0 %v511
  %v830 = vpop.f32.mrf.mxu0
  %v831 = vadd.f32 %v662, %v830
  %v832 = vpop.f32.mrf.mxu0
  %v833 = vadd.f32 %v664, %v832
  %834 = vmatmul.bf16.gmra.mxu0 %v514
  %v835 = vpop.f32.mrf.mxu0
  %v836 = vadd.f32 %v667, %v835
  %v837 = vpop.f32.mrf.mxu0
  %v838 = vadd.f32 %v669, %v837
  %839 = vmatmul.bf16.gmra.mxu0 %v517
  %v840 = vpop.f32.mrf.mxu0
  %v841 = vadd.f32 %v672, %v840
  %v842 = vpop.f32.mrf.mxu0
  %v843 = vadd.f32 %v674, %v842
  %844 = vmatmul.bf16.gmra.mxu0 %v520
  %v845 = vpop.f32.mrf.mxu0
  %v846 = vadd.f32 %v677, %v845
  %v847 = vpop.f32.mrf.mxu0
  %v848 = vadd.f32 %v679, %v847
  %849 = vmatmul.bf16.gmra.mxu0 %v523
  %v850 = vpop.f32.mrf.mxu0
  %v851 = vadd.f32 %v682, %v850
  %v852 = vpop.f32.mrf.mxu0
  %v853 = vadd.f32 %v684, %v852
  %854 = vmatmul.bf16.gmra.mxu0 %v526
  %v855 = vpop.f32.mrf.mxu0
  %v856 = vadd.f32 %v687, %v855
  %v857 = vpop.f32.mrf.mxu0
  %v858 = vadd.f32 %v689, %v857
  %859 = vmatmul.bf16.gmra.mxu0 %v529
  %v860 = vpop.f32.mrf.mxu0
  %v861 = vadd.f32 %v692, %v860
  %v862 = vpop.f32.mrf.mxu0
  %v863 = vadd.f32 %v694, %v862
  %864 = vmatmul.bf16.gmra.mxu0 %v532
  %v865 = vpop.f32.mrf.mxu0
  %v866 = vadd.f32 %v697, %v865
  %v867 = vpop.f32.mrf.mxu0
  %v868 = vadd.f32 %v699, %v867
  %869 = vmatmul.bf16.gmra.mxu0 %v535
  %v870 = vpop.f32.mrf.mxu0
  %v871 = vadd.f32 %v702, %v870
  %v872 = vpop.f32.mrf.mxu0
  %v873 = vadd.f32 %v704, %v872
  %874 = vmatmul.bf16.gmra.mxu0 %v538
  %v875 = vpop.f32.mrf.mxu0
  %v876 = vadd.f32 %v707, %v875
  %v877 = vpop.f32.mrf.mxu0
  %v878 = vadd.f32 %v709, %v877
  %879 = vmatmul.bf16.gmra.mxu0 %v541
  %v880 = vpop.f32.mrf.mxu0
  %v881 = vadd.f32 %v712, %v880
  %v882 = vpop.f32.mrf.mxu0
  %v883 = vadd.f32 %v714, %v882
  %884 = vdwg.mxu0
  %v885 = vld [vmem:[%s2] sm:$0x1]
  %v887 = vperm.slane %v885, 0
  %v889 = vmul.f32 %v726, %v887
  %v890 = vmul.f32 %v728, %v887
  %v891 = vmul.f32 %v731, %v887
  %v892 = vmul.f32 %v733, %v887
  %v893 = vmul.f32 %v736, %v887
  %v894 = vmul.f32 %v738, %v887
  %v895 = vmul.f32 %v741, %v887
  %v896 = vmul.f32 %v743, %v887
  %v897 = vmul.f32 %v746, %v887
  %v898 = vmul.f32 %v748, %v887
  %v899 = vmul.f32 %v751, %v887
  %v900 = vmul.f32 %v753, %v887
  %v901 = vmul.f32 %v756, %v887
  %v902 = vmul.f32 %v758, %v887
  %v903 = vmul.f32 %v761, %v887
  %v904 = vmul.f32 %v763, %v887
  %v905 = vmul.f32 %v766, %v887
  %v906 = vmul.f32 %v768, %v887
  %v907 = vmul.f32 %v771, %v887
  %v908 = vmul.f32 %v773, %v887
  %v909 = vmul.f32 %v776, %v887
  %v910 = vmul.f32 %v778, %v887
  %v911 = vmul.f32 %v781, %v887
  %v912 = vmul.f32 %v783, %v887
  %v913 = vmul.f32 %v786, %v887
  %v914 = vmul.f32 %v788, %v887
  %v915 = vmul.f32 %v791, %v887
  %v916 = vmul.f32 %v793, %v887
  %v917 = vmul.f32 %v796, %v887
  %v918 = vmul.f32 %v798, %v887
  %v919 = vmul.f32 %v801, %v887
  %v920 = vmul.f32 %v803, %v887
  %v921 = vmul.f32 %v806, %v887
  %v922 = vmul.f32 %v808, %v887
  %v923 = vmul.f32 %v811, %v887
  %v924 = vmul.f32 %v813, %v887
  %v925 = vmul.f32 %v816, %v887
  %v926 = vmul.f32 %v818, %v887
  %v927 = vmul.f32 %v821, %v887
  %v928 = vmul.f32 %v823, %v887
  %v929 = vmul.f32 %v826, %v887
  %v930 = vmul.f32 %v828, %v887
  %v931 = vmul.f32 %v831, %v887
  %v932 = vmul.f32 %v833, %v887
  %v933 = vmul.f32 %v836, %v887
  %v934 = vmul.f32 %v838, %v887
  %v935 = vmul.f32 %v841, %v887
  %v936 = vmul.f32 %v843, %v887
  %v937 = vmul.f32 %v846, %v887
  %v938 = vmul.f32 %v848, %v887
  %v939 = vmul.f32 %v851, %v887
  %v940 = vmul.f32 %v853, %v887
  %v941 = vmul.f32 %v856, %v887
  %v942 = vmul.f32 %v858, %v887
  %v943 = vmul.f32 %v861, %v887
  %v944 = vmul.f32 %v863, %v887
  %v945 = vmul.f32 %v866, %v887
  %v946 = vmul.f32 %v868, %v887
  %v947 = vmul.f32 %v871, %v887
  %v948 = vmul.f32 %v873, %v887
  %v949 = vmul.f32 %v876, %v887
  %v950 = vmul.f32 %v878, %v887
  %v951 = vmul.f32 %v881, %v887
  %v952 = vmul.f32 %v883, %v887
  %v953 = vld [vmem:[%s3] sm:$0x1]
  %v955 = vperm.slane %v953, 0
  %v957 = vadd.f32 %v889, %v955
  %v958 = vadd.f32 %v890, %v955
  %v959 = vadd.f32 %v891, %v955
  %v960 = vadd.f32 %v892, %v955
  %v961 = vadd.f32 %v893, %v955
  %v962 = vadd.f32 %v894, %v955
  %v963 = vadd.f32 %v895, %v955
  %v964 = vadd.f32 %v896, %v955
  %v965 = vadd.f32 %v897, %v955
  %v966 = vadd.f32 %v898, %v955
  %v967 = vadd.f32 %v899, %v955
  %v968 = vadd.f32 %v900, %v955
  %v969 = vadd.f32 %v901, %v955
  %v970 = vadd.f32 %v902, %v955
  %v971 = vadd.f32 %v903, %v955
  %v972 = vadd.f32 %v904, %v955
  %v973 = vadd.f32 %v905, %v955
  %v974 = vadd.f32 %v906, %v955
  %v975 = vadd.f32 %v907, %v955
  %v976 = vadd.f32 %v908, %v955
  %v977 = vadd.f32 %v909, %v955
  %v978 = vadd.f32 %v910, %v955
  %v979 = vadd.f32 %v911, %v955
  %v980 = vadd.f32 %v912, %v955
  %v981 = vadd.f32 %v913, %v955
  %v982 = vadd.f32 %v914, %v955
  %v983 = vadd.f32 %v915, %v955
  %v984 = vadd.f32 %v916, %v955
  %v985 = vadd.f32 %v917, %v955
  %v986 = vadd.f32 %v918, %v955
  %v987 = vadd.f32 %v919, %v955
  %v988 = vadd.f32 %v920, %v955
  %v989 = vadd.f32 %v921, %v955
  %v990 = vadd.f32 %v922, %v955
  %v991 = vadd.f32 %v923, %v955
  %v992 = vadd.f32 %v924, %v955
  %v993 = vadd.f32 %v925, %v955
  %v994 = vadd.f32 %v926, %v955
  %v995 = vadd.f32 %v927, %v955
  %v996 = vadd.f32 %v928, %v955
  %v997 = vadd.f32 %v929, %v955
  %v998 = vadd.f32 %v930, %v955
  %v999 = vadd.f32 %v931, %v955
  %v1000 = vadd.f32 %v932, %v955
  %v1001 = vadd.f32 %v933, %v955
  %v1002 = vadd.f32 %v934, %v955
  %v1003 = vadd.f32 %v935, %v955
  %v1004 = vadd.f32 %v936, %v955
  %v1005 = vadd.f32 %v937, %v955
  %v1006 = vadd.f32 %v938, %v955
  %v1007 = vadd.f32 %v939, %v955
  %v1008 = vadd.f32 %v940, %v955
  %v1009 = vadd.f32 %v941, %v955
  %v1010 = vadd.f32 %v942, %v955
  %v1011 = vadd.f32 %v943, %v955
  %v1012 = vadd.f32 %v944, %v955
  %v1013 = vadd.f32 %v945, %v955
  %v1014 = vadd.f32 %v946, %v955
  %v1015 = vadd.f32 %v947, %v955
  %v1016 = vadd.f32 %v948, %v955
  %v1017 = vadd.f32 %v949, %v955
  %v1018 = vadd.f32 %v950, %v955
  %v1019 = vadd.f32 %v951, %v955
  %v1020 = vadd.f32 %v952, %v955
  %v1021 = vmax.f32 %v957, 0.0
  %v1022 = vmax.f32 %v958, 0.0
  %v1023 = vmax.f32 %v959, 0.0
  %v1024 = vmax.f32 %v960, 0.0
  %v1025 = vmax.f32 %v961, 0.0
  %v1026 = vmax.f32 %v962, 0.0
  %v1027 = vmax.f32 %v963, 0.0
  %v1028 = vmax.f32 %v964, 0.0
  %v1029 = vmax.f32 %v965, 0.0
  %v1030 = vmax.f32 %v966, 0.0
  %v1031 = vmax.f32 %v967, 0.0
  %v1032 = vmax.f32 %v968, 0.0
  %v1033 = vmax.f32 %v969, 0.0
  %v1034 = vmax.f32 %v970, 0.0
  %v1035 = vmax.f32 %v971, 0.0
  %v1036 = vmax.f32 %v972, 0.0
  %v1037 = vmax.f32 %v973, 0.0
  %v1038 = vmax.f32 %v974, 0.0
  %v1039 = vmax.f32 %v975, 0.0
  %v1040 = vmax.f32 %v976, 0.0
  %v1041 = vmax.f32 %v977, 0.0
  %v1042 = vmax.f32 %v978, 0.0
  %v1043 = vmax.f32 %v979, 0.0
  %v1044 = vmax.f32 %v980, 0.0
  %v1045 = vmax.f32 %v981, 0.0
  %v1046 = vmax.f32 %v982, 0.0
  %v1047 = vmax.f32 %v983, 0.0
  %v1048 = vmax.f32 %v984, 0.0
  %v1049 = vmax.f32 %v985, 0.0
  %v1050 = vmax.f32 %v986, 0.0
  %v1051 = vmax.f32 %v987, 0.0
  %v1052 = vmax.f32 %v988, 0.0
  %v1053 = vmax.f32 %v989, 0.0
  %v1054 = vmax.f32 %v990, 0.0
  %v1055 = vmax.f32 %v991, 0.0
  %v1056 = vmax.f32 %v992, 0.0
  %v1057 = vmax.f32 %v993, 0.0
  %v1058 = vmax.f32 %v994, 0.0
  %v1059 = vmax.f32 %v995, 0.0
  %v1060 = vmax.f32 %v996, 0.0
  %v1061 = vmax.f32 %v997, 0.0
  %v1062 = vmax.f32 %v998, 0.0
  %v1063 = vmax.f32 %v999, 0.0
  %v1064 = vmax.f32 %v1000, 0.0
  %v1065 = vmax.f32 %v1001, 0.0
  %v1066 = vmax.f32 %v1002, 0.0
  %v1067 = vmax.f32 %v1003, 0.0
  %v1068 = vmax.f32 %v1004, 0.0
  %v1069 = vmax.f32 %v1005, 0.0
  %v1070 = vmax.f32 %v1006, 0.0
  %v1071 = vmax.f32 %v1007, 0.0
  %v1072 = vmax.f32 %v1008, 0.0
  %v1073 = vmax.f32 %v1009, 0.0
  %v1074 = vmax.f32 %v1010, 0.0
  %v1075 = vmax.f32 %v1011, 0.0
  %v1076 = vmax.f32 %v1012, 0.0
  %v1077 = vmax.f32 %v1013, 0.0
  %v1078 = vmax.f32 %v1014, 0.0
  %v1079 = vmax.f32 %v1015, 0.0
  %v1080 = vmax.f32 %v1016, 0.0
  %v1081 = vmax.f32 %v1017, 0.0
  %v1082 = vmax.f32 %v1018, 0.0
  %v1083 = vmax.f32 %v1019, 0.0
  %v1084 = vmax.f32 %v1020, 0.0
  %v1085 = vpack.c.bf16 %v1021, %v1021
  %v1086 = vpack.c.bf16 %v1022, %v1022
  %v1087 = vpack.c.bf16 %v1023, %v1023
  %v1088 = vpack.c.bf16 %v1024, %v1024
  %v1089 = vpack.c.bf16 %v1025, %v1025
  %v1090 = vpack.c.bf16 %v1026, %v1026
  %v1091 = vpack.c.bf16 %v1027, %v1027
  %v1092 = vpack.c.bf16 %v1028, %v1028
  %v1093 = vpack.c.bf16 %v1029, %v1029
  %v1094 = vpack.c.bf16 %v1030, %v1030
  %v1095 = vpack.c.bf16 %v1031, %v1031
  %v1096 = vpack.c.bf16 %v1032, %v1032
  %v1097 = vpack.c.bf16 %v1033, %v1033
  %v1098 = vpack.c.bf16 %v1034, %v1034
  %v1099 = vpack.c.bf16 %v1035, %v1035
  %v1100 = vpack.c.bf16 %v1036, %v1036
  %v1101 = vpack.c.bf16 %v1037, %v1037
  %v1102 = vpack.c.bf16 %v1038, %v1038
  %v1103 = vpack.c.bf16 %v1039, %v1039
  %v1104 = vpack.c.bf16 %v1040, %v1040
  %v1105 = vpack.c.bf16 %v1041, %v1041
  %v1106 = vpack.c.bf16 %v1042, %v1042
  %v1107 = vpack.c.bf16 %v1043, %v1043
  %v1108 = vpack.c.bf16 %v1044, %v1044
  %v1109 = vpack.c.bf16 %v1045, %v1045
  %v1110 = vpack.c.bf16 %v1046, %v1046
  %v1111 = vpack.c.bf16 %v1047, %v1047
  %v1112 = vpack.c.bf16 %v1048, %v1048
  %v1113 = vpack.c.bf16 %v1049, %v1049
  %v1114 = vpack.c.bf16 %v1050, %v1050
  %v1115 = vpack.c.bf16 %v1051, %v1051
  %v1116 = vpack.c.bf16 %v1052, %v1052
  %v1117 = vpack.c.bf16 %v1053, %v1053
  %v1118 = vpack.c.bf16 %v1054, %v1054
  %v1119 = vpack.c.bf16 %v1055, %v1055
  %v1120 = vpack.c.bf16 %v1056, %v1056
  %v1121 = vpack.c.bf16 %v1057, %v1057
  %v1122 = vpack.c.bf16 %v1058, %v1058
  %v1123 = vpack.c.bf16 %v1059, %v1059
  %v1124 = vpack.c.bf16 %v1060, %v1060
  %v1125 = vpack.c.bf16 %v1061, %v1061
  %v1126 = vpack.c.bf16 %v1062, %v1062
  %v1127 = vpack.c.bf16 %v1063, %v1063
  %v1128 = vpack.c.bf16 %v1064, %v1064
  %v1129 = vpack.c.bf16 %v1065, %v1065
  %v1130 = vpack.c.bf16 %v1066, %v1066
  %v1131 = vpack.c.bf16 %v1067, %v1067
  %v1132 = vpack.c.bf16 %v1068, %v1068
  %v1133 = vpack.c.bf16 %v1069, %v1069
  %v1134 = vpack.c.bf16 %v1070, %v1070
  %v1135 = vpack.c.bf16 %v1071, %v1071
  %v1136 = vpack.c.bf16 %v1072, %v1072
  %v1137 = vpack.c.bf16 %v1073, %v1073
  %v1138 = vpack.c.bf16 %v1074, %v1074
  %v1139 = vpack.c.bf16 %v1075, %v1075
  %v1140 = vpack.c.bf16 %v1076, %v1076
  %v1141 = vpack.c.bf16 %v1077, %v1077
  %v1142 = vpack.c.bf16 %v1078, %v1078
  %v1143 = vpack.c.bf16 %v1079, %v1079
  %v1144 = vpack.c.bf16 %v1080, %v1080
  %v1145 = vpack.c.bf16 %v1081, %v1081
  %v1146 = vpack.c.bf16 %v1082, %v1082
  %v1147 = vpack.c.bf16 %v1083, %v1083
  %v1148 = vpack.c.bf16 %v1084, %v1084
  %vm1149 = vcmask 519168
  %1150 = vst.msk [vmem:[%s4] sm:$0xf] %vm1149, %v1085
  %1151 = vst.msk [vmem:[%s4 + $0x4] sm:$0xf] %vm1149, %v1086
  %1152 = vst.msk [vmem:[%s4 + $0x8] sm:$0xf] %vm1149, %v1087
  %1153 = vst.msk [vmem:[%s4 + $0xc] sm:$0xf] %vm1149, %v1088
  %1154 = vst.msk [vmem:[%s4 + $0x10] sm:$0xf] %vm1149, %v1089
  %1155 = vst.msk [vmem:[%s4 + $0x14] sm:$0xf] %vm1149, %v1090
  %1156 = vst.msk [vmem:[%s4 + $0x18] sm:$0xf] %vm1149, %v1091
  %1157 = vst.msk [vmem:[%s4 + $0x1c] sm:$0xf] %vm1149, %v1092
  %1158 = vst.msk [vmem:[%s4 + $0x20] sm:$0xf] %vm1149, %v1093
  %1159 = vst.msk [vmem:[%s4 + $0x24] sm:$0xf] %vm1149, %v1094
  %1160 = vst.msk [vmem:[%s4 + $0x28] sm:$0xf] %vm1149, %v1095
  %1161 = vst.msk [vmem:[%s4 + $0x2c] sm:$0xf] %vm1149, %v1096
  %1162 = vst.msk [vmem:[%s4 + $0x30] sm:$0xf] %vm1149, %v1097
  %1163 = vst.msk [vmem:[%s4 + $0x34] sm:$0xf] %vm1149, %v1098
  %1164 = vst.msk [vmem:[%s4 + $0x38] sm:$0xf] %vm1149, %v1099
  %1165 = vst.msk [vmem:[%s4 + $0x3c] sm:$0xf] %vm1149, %v1100
  %1166 = vst.msk [vmem:[%s4 + $0x40] sm:$0xf] %vm1149, %v1101
  %1167 = vst.msk [vmem:[%s4 + $0x44] sm:$0xf] %vm1149, %v1102
  %1168 = vst.msk [vmem:[%s4 + $0x48] sm:$0xf] %vm1149, %v1103
  %1169 = vst.msk [vmem:[%s4 + $0x4c] sm:$0xf] %vm1149, %v1104
  %1170 = vst.msk [vmem:[%s4 + $0x50] sm:$0xf] %vm1149, %v1105
  %1171 = vst.msk [vmem:[%s4 + $0x54] sm:$0xf] %vm1149, %v1106
  %1172 = vst.msk [vmem:[%s4 + $0x58] sm:$0xf] %vm1149, %v1107
  %1173 = vst.msk [vmem:[%s4 + $0x5c] sm:$0xf] %vm1149, %v1108
  %1174 = vst.msk [vmem:[%s4 + $0x60] sm:$0xf] %vm1149, %v1109
  %1175 = vst.msk [vmem:[%s4 + $0x64] sm:$0xf] %vm1149, %v1110
  %1176 = vst.msk [vmem:[%s4 + $0x68] sm:$0xf] %vm1149, %v1111
  %1177 = vst.msk [vmem:[%s4 + $0x6c] sm:$0xf] %vm1149, %v1112
  %1178 = vst.msk [vmem:[%s4 + $0x70] sm:$0xf] %vm1149, %v1113
  %1179 = vst.msk [vmem:[%s4 + $0x74] sm:$0xf] %vm1149, %v1114
  %1180 = vst.msk [vmem:[%s4 + $0x78] sm:$0xf] %vm1149, %v1115
  %1181 = vst.msk [vmem:[%s4 + $0x7c] sm:$0xf] %vm1149, %v1116
  %1182 = vst.msk [vmem:[%s4 + $0x80] sm:$0xf] %vm1149, %v1117
  %1183 = vst.msk [vmem:[%s4 + $0x84] sm:$0xf] %vm1149, %v1118
  %1184 = vst.msk [vmem:[%s4 + $0x88] sm:$0xf] %vm1149, %v1119
  %1185 = vst.msk [vmem:[%s4 + $0x8c] sm:$0xf] %vm1149, %v1120
  %1186 = vst.msk [vmem:[%s4 + $0x90] sm:$0xf] %vm1149, %v1121
  %1187 = vst.msk [vmem:[%s4 + $0x94] sm:$0xf] %vm1149, %v1122
  %1188 = vst.msk [vmem:[%s4 + $0x98] sm:$0xf] %vm1149, %v1123
  %1189 = vst.msk [vmem:[%s4 + $0x9c] sm:$0xf] %vm1149, %v1124
  %1190 = vst.msk [vmem:[%s4 + $0xa0] sm:$0xf] %vm1149, %v1125
  %1191 = vst.msk [vmem:[%s4 + $0xa4] sm:$0xf] %vm1149, %v1126
  %1192 = vst.msk [vmem:[%s4 + $0xa8] sm:$0xf] %vm1149, %v1127
  %1193 = vst.msk [vmem:[%s4 + $0xac] sm:$0xf] %vm1149, %v1128
  %1194 = vst.msk [vmem:[%s4 + $0xb0] sm:$0xf] %vm1149, %v1129
  %1195 = vst.msk [vmem:[%s4 + $0xb4] sm:$0xf] %vm1149, %v1130
  %1196 = vst.msk [vmem:[%s4 + $0xb8] sm:$0xf] %vm1149, %v1131
  %1197 = vst.msk [vmem:[%s4 + $0xbc] sm:$0xf] %vm1149, %v1132
  %1198 = vst.msk [vmem:[%s4 + $0xc0] sm:$0xf] %vm1149, %v1133
  %1199 = vst.msk [vmem:[%s4 + $0xc4] sm:$0xf] %vm1149, %v1134
  %1200 = vst.msk [vmem:[%s4 + $0xc8] sm:$0xf] %vm1149, %v1135
  %1201 = vst.msk [vmem:[%s4 + $0xcc] sm:$0xf] %vm1149, %v1136
  %1202 = vst.msk [vmem:[%s4 + $0xd0] sm:$0xf] %vm1149, %v1137
  %1203 = vst.msk [vmem:[%s4 + $0xd4] sm:$0xf] %vm1149, %v1138
  %1204 = vst.msk [vmem:[%s4 + $0xd8] sm:$0xf] %vm1149, %v1139
  %1205 = vst.msk [vmem:[%s4 + $0xdc] sm:$0xf] %vm1149, %v1140
  %1206 = vst.msk [vmem:[%s4 + $0xe0] sm:$0xf] %vm1149, %v1141
  %1207 = vst.msk [vmem:[%s4 + $0xe4] sm:$0xf] %vm1149, %v1142
  %1208 = vst.msk [vmem:[%s4 + $0xe8] sm:$0xf] %vm1149, %v1143
  %1209 = vst.msk [vmem:[%s4 + $0xec] sm:$0xf] %vm1149, %v1144
  %1210 = vst.msk [vmem:[%s4 + $0xf0] sm:$0xf] %vm1149, %v1145
  %1211 = vst.msk [vmem:[%s4 + $0xf4] sm:$0xf] %vm1149, %v1146
  %1212 = vst.msk [vmem:[%s4 + $0xf8] sm:$0xf] %vm1149, %v1147
  %1213 = vst.msk [vmem:[%s4 + $0xfc] sm:$0xf] %vm1149, %v1148
  // Predicated region
  $region18: #{tpu_custom_call.1} parent=0 // pred_check
    _
  $region19: #{tpu_custom_call.1} parent=0 // pred_check_branch
    %1215 = sbr.rel (0) target = $region21
  $region20: #{tpu_custom_call.1} parent=0 // pred_region
    _
  $region21: #{tpu_custom_call.1} parent=0 // pred_fallthru
    _
  // Predicated region
  $region22: #{tpu_custom_call.1} parent=0 // pred_check
    _
  $region23: #{tpu_custom_call.1} parent=0 // pred_check_branch
    %1217 = sbr.rel (0) target = $region25
  $region24: #{tpu_custom_call.1} parent=0 // pred_region
    _
  $region25: #{tpu_custom_call.1} parent=0 // pred_fallthru
    _

</llo_original>
